<compile_context>
chip_gen: v7x
topology: tpu7x:2x2x1
jax: 0.10.0
libtpu: 0.0.40
codegen_flags: <defaults>
</compile_context>

<pallas_src>
import jax
import jax.numpy as jnp
from jax.experimental import pallas as pl
from jax.experimental.pallas import tpu as pltpu

IN_DIM = 784
HID_DIM = 200
OUT_DIM = 10
LN_EPS = 1e-5          # PyTorch nn.LayerNorm default


def _cdiv(a, b):
    return (a + b - 1) // b


def _round_up(n, m):
    return ((n + m - 1) // m) * m


def fnn_kernel(x_ref, w1_ref, b1_ref, w2_ref, b2_ref, o_ref):
    # ---- Linear(784 -> 200) + Sigmoid : bf16 MXU matmul, f32 accumulation ----
    # Cast to bf16 here (not in the wrapper) so x is read from HBM exactly once.
    x = x_ref[...].astype(jnp.bfloat16)
    h = jnp.dot(x, w1_ref[...], preferred_element_type=jnp.float32)
    h = jax.nn.sigmoid(h + b1_ref[...])                        # (TB, 200) f32

    # ---- LayerNorm(200): single-pass fused reductions, biased variance ----
    # (gamma/beta affine is folded into w2/b2 by prepare_params; math identical.
    #  E[x^2]-E[x]^2 rewrite is safe: sigmoid bounds h to (0,1), eps dominates.)
    s1 = jnp.sum(h, axis=-1, keepdims=True)                    # (TB, 1)
    s2 = jnp.sum(h * h, axis=-1, keepdims=True)                # (TB, 1)
    mean = s1 * (1.0 / HID_DIM)
    var = s2 * (1.0 / HID_DIM) - mean * mean
    h_norm = (h - mean) * jax.lax.rsqrt(var + LN_EPS)

    # ---- Linear(200 -> 10) + Sigmoid ----
    y = jnp.dot(h_norm.astype(jnp.bfloat16), w2_ref[...],
                preferred_element_type=jnp.float32)
    o_ref[...] = jax.nn.sigmoid(y + b2_ref[...])               # (TB, 10) f32


def prepare_params(params):
    """One-time parameter prep (call once, outside the serving path).

    Folds the LayerNorm affine into the second linear layer (exact rewrite):
      (h_norm * gamma + beta) @ w2 + b2 == h_norm @ (gamma^T * w2) + (beta @ w2 + b2)
    and casts matmul weights to bf16 (fold in f32 first, cast last).
    """
    w1, b1, gamma, beta, w2, b2 = params
    w2_fold = gamma.reshape(HID_DIM, 1) * w2                   # (200, 10) f32
    b2_fold = (beta @ w2 + b2).reshape(1, OUT_DIM)             # (1, 10)  f32
    return (w1.astype(jnp.bfloat16),
            b1.reshape(1, HID_DIM).astype(jnp.float32),
            w2_fold.astype(jnp.bfloat16),
            b2_fold.astype(jnp.float32))


def classifier_forward(x, prepared_params, *, block_b=1024):
    """x: (B, 784) f32, prepared_params from prepare_params() -> (B, 10) f32."""
    w1_bf, b1, w2_bf, b2 = prepared_params
    B = x.shape[0]

    # Batch tiling (f32 -> row multiple of 8). Aim for >=2 grid steps so both
    # TensorCores get work on megacore/v7x, capped at block_b rows per tile.
    half = _round_up(_cdiv(B, 2), 8)
    tb = max(8, min(block_b, half))
    b_pad = _round_up(B, tb)
    if b_pad != B:
        x = jnp.pad(x, ((0, b_pad - B), (0, 0)))
    grid = (b_pad // tb,)

    cost = pl.CostEstimate(
        flops=2 * b_pad * (IN_DIM * HID_DIM + HID_DIM * OUT_DIM),
        transcendentals=b_pad * (HID_DIM + OUT_DIM + 1),
        bytes_accessed=(b_pad * IN_DIM * 4          # x (f32, read once)
                        + w1_bf.size * 2 + b1.size * 4
                        + w2_bf.size * 2 + b2.size * 4
                        + b_pad * OUT_DIM * 4),     # unpadded output
    )

    out = pl.pallas_call(
        fnn_kernel,
        out_shape=jax.ShapeDtypeStruct((b_pad, OUT_DIM), jnp.float32),
        grid_spec=pltpu.PrefetchScalarGridSpec(
            num_scalar_prefetch=0,
            grid=grid,
            in_specs=[
                # streamed: one batch tile per grid step (double-buffered by Pallas)
                pl.BlockSpec((tb, IN_DIM), lambda i: (i, 0)),
                # resident weights/biases: constant block index -> DMA'd once
                pl.BlockSpec((IN_DIM, HID_DIM), lambda i: (0, 0)),
                pl.BlockSpec((1, HID_DIM), lambda i: (0, 0)),
                pl.BlockSpec((HID_DIM, OUT_DIM), lambda i: (0, 0)),
                pl.BlockSpec((1, OUT_DIM), lambda i: (0, 0)),
            ],
            # last dim == full array dim (10), so the narrow block is legal and
            # the HBM writeback is exactly the useful 40 B/row.
            out_specs=pl.BlockSpec((tb, OUT_DIM), lambda i: (i, 0)),
        ),
        compiler_params=pltpu.CompilerParams(
            # batch tiles are independent -> shard across TCs on megacore/v7x
            dimension_semantics=("parallel",),
            # explicit budget so tb up to ~2K rows is safe even on v5e's
            # 16 MiB default scoped-VMEM limit.
            vmem_limit_bytes=32 << 20,
        ),
        cost_estimate=cost,
    )(x, w1_bf, b1, w2_bf, b2)

    return out[:B] if b_pad != B else out


def init_params(key):
    """Deterministic init mirroring PyTorch Linear default (U(-1/sqrt(fan_in), +))."""
    k1, k2, k3, k4 = jax.random.split(key, 4)
    bound1 = 1.0 / jnp.sqrt(IN_DIM)
    w1 = jax.random.uniform(k1, (IN_DIM, HID_DIM), jnp.float32, -bound1, bound1)
    b1 = jax.random.uniform(k2, (1, HID_DIM), jnp.float32, -bound1, bound1)
    gamma = jnp.ones((1, HID_DIM), jnp.float32)   # LayerNorm weight default
    beta = jnp.zeros((1, HID_DIM), jnp.float32)   # LayerNorm bias default
    bound2 = 1.0 / jnp.sqrt(HID_DIM)
    w2 = jax.random.uniform(k3, (HID_DIM, OUT_DIM), jnp.float32, -bound2, bound2)
    b2 = jax.random.uniform(k4, (1, OUT_DIM), jnp.float32, -bound2, bound2)
    return w1, b1, gamma, beta, w2, b2


def reference_forward(x, params):
    """Pure-JAX f32 reference replicating PyTorch semantics."""
    w1, b1, gamma, beta, w2, b2 = params
    h = jax.nn.sigmoid(x @ w1 + b1)
    mean = jnp.mean(h, axis=-1, keepdims=True)
    var = jnp.mean((h - mean) ** 2, axis=-1, keepdims=True)
    h = (h - mean) / jnp.sqrt(var + LN_EPS) * gamma + beta
    return jax.nn.sigmoid(h @ w2 + b2)


# TODO(synk): training utilities of the PyTorch module (MSELoss, SGD step,
# progress plotting) are host-side training code, not part of the forward pass,
# and are intentionally not implemented as kernels.

if __name__ == "__main__":
    key = jax.random.PRNGKey(0)
    kx, kp = jax.random.split(key)

    B = 8  # small batch of flattened 28x28 MNIST images
    x = jax.random.uniform(kx, (B, IN_DIM), jnp.float32)  # pixel-like inputs in [0, 1)
    params = init_params(kp)
    prepped = prepare_params(params)   # one-time prep (fold LN affine, bf16 casts)

    out = classifier_forward(x, prepped)
    out = jax.block_until_ready(out)

    ref = reference_forward(x, params)
    assert out.shape == (B, OUT_DIM)
    # bf16 MXU operands with f32 accumulation: loose-but-safe tolerance vs f32 ref.
    assert jnp.allclose(out, ref, atol=2e-2, rtol=0.0), float(jnp.max(jnp.abs(out - ref)))

    print("KERNEL_OK")
</pallas_src>

<mosaic_0001>
module attributes {stable_mosaic.version = 11 : i64} {
  func.func @fnn_kernel(%arg0: i32, %arg1: memref<8x784xf32, #tpu.memory_space<vmem>>, %arg2: memref<784x200xbf16, #tpu.memory_space<vmem>>, %arg3: memref<1x200xf32, #tpu.memory_space<vmem>>, %arg4: memref<200x10xbf16, #tpu.memory_space<vmem>>, %arg5: memref<1x10xf32, #tpu.memory_space<vmem>>, %arg6: memref<8x10xf32, #tpu.memory_space<vmem>>) attributes {dimension_semantics = [#tpu.dimension_semantics<parallel>], iteration_bounds = array<i64: 1>, scalar_prefetch = 0 : i64, scratch_operands = 0 : i64, tpu.core_type = #tpu.core_type<tc>, window_params = [{transform_indices = @transform_0, window_bounds = array<i64: 8, 784>}, {pipeline_mode = #tpu.pipeline_mode<synchronous>, transform_indices = @transform_1, window_bounds = array<i64: 784, 200>}, {pipeline_mode = #tpu.pipeline_mode<synchronous>, transform_indices = @transform_2, window_bounds = array<i64: 1, 200>}, {pipeline_mode = #tpu.pipeline_mode<synchronous>, transform_indices = @transform_3, window_bounds = array<i64: 200, 10>}, {pipeline_mode = #tpu.pipeline_mode<synchronous>, transform_indices = @transform_4, window_bounds = array<i64: 1, 10>}, {transform_indices = @transform_5, window_bounds = array<i64: 8, 10>}]} {
    %c0 = arith.constant 0 : index
    %c0_0 = arith.constant 0 : index
    %0 = vector.load %arg1[%c0, %c0_0] : memref<8x784xf32, #tpu.memory_space<vmem>>, vector<8x784xf32>
    %1 = arith.truncf %0 : vector<8x784xf32> to vector<8x784xbf16>
    %c0_1 = arith.constant 0 : index
    %c0_2 = arith.constant 0 : index
    %2 = vector.load %arg2[%c0_1, %c0_2] : memref<784x200xbf16, #tpu.memory_space<vmem>>, vector<784x200xbf16>
    %cst = arith.constant dense<0.000000e+00> : vector<8x200xf32>
    %3 = tpu.matmul %1, %2, %cst {dimension_numbers = #tpu.dot_dimension_numbers<[1], [0], [0], [1], [0, 0, 1, 1], [], []>} : vector<8x784xbf16>, vector<784x200xbf16>, vector<8x200xf32> -> vector<8x200xf32>
    %c0_3 = arith.constant 0 : index
    %c0_4 = arith.constant 0 : index
    %4 = vector.load %arg3[%c0_3, %c0_4] : memref<1x200xf32, #tpu.memory_space<vmem>>, vector<1x200xf32>
    %5 = vector.broadcast %4 : vector<1x200xf32> to vector<8x200xf32>
    %6 = arith.addf %3, %5 : vector<8x200xf32>
    %7 = arith.negf %6 : vector<8x200xf32>
    %8 = math.exp %7 : vector<8x200xf32>
    %cst_5 = arith.constant 1.000000e+00 : f32
    %9 = vector.broadcast %cst_5 : f32 to vector<8x200xf32>
    %10 = arith.addf %9, %8 : vector<8x200xf32>
    %11 = arith.divf %9, %10 : vector<8x200xf32>
    %cst_6 = arith.constant dense<0.000000e+00> : vector<8xf32>
    %12 = vector.multi_reduction <add>, %11, %cst_6 [1] : vector<8x200xf32> to vector<8xf32>
    %13 = vector.shape_cast %12 : vector<8xf32> to vector<8x1xf32>
    %14 = arith.mulf %11, %11 : vector<8x200xf32>
    %cst_7 = arith.constant dense<0.000000e+00> : vector<8xf32>
    %15 = vector.multi_reduction <add>, %14, %cst_7 [1] : vector<8x200xf32> to vector<8xf32>
    %16 = vector.shape_cast %15 : vector<8xf32> to vector<8x1xf32>
    %cst_8 = arith.constant 5.000000e-03 : f32
    %17 = vector.broadcast %cst_8 : f32 to vector<8x1xf32>
    %18 = arith.mulf %13, %17 : vector<8x1xf32>
    %cst_9 = arith.constant 5.000000e-03 : f32
    %19 = vector.broadcast %cst_9 : f32 to vector<8x1xf32>
    %20 = arith.mulf %16, %19 : vector<8x1xf32>
    %21 = arith.mulf %18, %18 : vector<8x1xf32>
    %22 = arith.subf %20, %21 : vector<8x1xf32>
    %23 = vector.broadcast %18 : vector<8x1xf32> to vector<8x200xf32>
    %24 = arith.subf %11, %23 : vector<8x200xf32>
    %cst_10 = arith.constant 9.99999974E-6 : f32
    %25 = vector.broadcast %cst_10 : f32 to vector<8x1xf32>
    %26 = arith.addf %22, %25 : vector<8x1xf32>
    %27 = math.rsqrt %26 : vector<8x1xf32>
    %28 = vector.broadcast %27 : vector<8x1xf32> to vector<8x200xf32>
    %29 = arith.mulf %24, %28 : vector<8x200xf32>
    %30 = arith.truncf %29 : vector<8x200xf32> to vector<8x200xbf16>
    %c0_11 = arith.constant 0 : index
    %c0_12 = arith.constant 0 : index
    %31 = vector.load %arg4[%c0_11, %c0_12] : memref<200x10xbf16, #tpu.memory_space<vmem>>, vector<200x10xbf16>
    %cst_13 = arith.constant dense<0.000000e+00> : vector<8x10xf32>
    %32 = tpu.matmul %30, %31, %cst_13 {dimension_numbers = #tpu.dot_dimension_numbers<[1], [0], [0], [1], [0, 0, 1, 1], [], []>} : vector<8x200xbf16>, vector<200x10xbf16>, vector<8x10xf32> -> vector<8x10xf32>
    %c0_14 = arith.constant 0 : index
    %c0_15 = arith.constant 0 : index
    %33 = vector.load %arg5[%c0_14, %c0_15] : memref<1x10xf32, #tpu.memory_space<vmem>>, vector<1x10xf32>
    %34 = vector.broadcast %33 : vector<1x10xf32> to vector<8x10xf32>
    %35 = arith.addf %32, %34 : vector<8x10xf32>
    %36 = arith.negf %35 : vector<8x10xf32>
    %37 = math.exp %36 : vector<8x10xf32>
    %cst_16 = arith.constant 1.000000e+00 : f32
    %38 = vector.broadcast %cst_16 : f32 to vector<8x10xf32>
    %39 = arith.addf %38, %37 : vector<8x10xf32>
    %40 = arith.divf %38, %39 : vector<8x10xf32>
    %c0_17 = arith.constant 0 : index
    %c0_18 = arith.constant 0 : index
    %41 = vector.load %arg6[%c0_17, %c0_18] : memref<8x10xf32, #tpu.memory_space<vmem>>, vector<8x10xf32>
    tpu.vector_store %arg6[%c0_17, %c0_18], %40 {strides = array<i32>} : memref<8x10xf32, #tpu.memory_space<vmem>>, vector<8x10xf32>,
    return
  }
  func.func @transform_0(%arg0: i32) -> (i32, i32) {
    %c0_i32 = arith.constant 0 : i32
    %c0_i32_0 = arith.constant 0 : i32
    return %arg0, %c0_i32 : i32, i32
  }
  func.func @transform_1(%arg0: i32) -> (i32, i32) {
    %c0_i32 = arith.constant 0 : i32
    %c0_i32_0 = arith.constant 0 : i32
    %c0_i32_1 = arith.constant 0 : i32
    return %c0_i32, %c0_i32_0 : i32, i32
  }
  func.func @transform_2(%arg0: i32) -> (i32, i32) {
    %c0_i32 = arith.constant 0 : i32
    %c0_i32_0 = arith.constant 0 : i32
    %c0_i32_1 = arith.constant 0 : i32
    return %c0_i32, %c0_i32_0 : i32, i32
  }
  func.func @transform_3(%arg0: i32) -> (i32, i32) {
    %c0_i32 = arith.constant 0 : i32
    %c0_i32_0 = arith.constant 0 : i32
    %c0_i32_1 = arith.constant 0 : i32
    return %c0_i32, %c0_i32_0 : i32, i32
  }
  func.func @transform_4(%arg0: i32) -> (i32, i32) {
    %c0_i32 = arith.constant 0 : i32
    %c0_i32_0 = arith.constant 0 : i32
    %c0_i32_1 = arith.constant 0 : i32
    return %c0_i32, %c0_i32_0 : i32, i32
  }
  func.func @transform_5(%arg0: i32) -> (i32, i32) {
    %c0_i32 = arith.constant 0 : i32
    %c0_i32_0 = arith.constant 0 : i32
    return %arg0, %c0_i32 : i32, i32
  }
}

</mosaic_0001>

<llo_original>
// kernel: tpu_custom_call.1
$region0: #{tpu_custom_call.1}
  #allocation0 [shape = 'u32[]', space=smem, size = 0x4, offset = 0x4, fixed_abs, tag = 'smem constant byte address 0x4 - core index']
  #allocation1 [shape = 'u32[144,128]{1,0:T(1,128)}', space=vmem, size = 0x12000, scoped, tag = 'internal scratch']
  %s0 = inlined_call_operand.vmem [shape: f32[8,784], index: 0, kind: input, shape index: {}]
  %s1 = inlined_call_operand.vmem [shape: bf16[784,200], index: 1, kind: input, shape index: {}]
  %s2 = inlined_call_operand.vmem [shape: f32[1,200], index: 2, kind: input, shape index: {}]
  %s3 = inlined_call_operand.vmem [shape: bf16[200,10], index: 3, kind: input, shape index: {}]
  %s4 = inlined_call_operand.vmem [shape: f32[1,10], index: 4, kind: input, shape index: {}]
  %s5 = inlined_call_operand.hbm [shape: f32[8,10], index: 5, kind: output, shape index: {}]
  %s6 = sld [smem:[#allocation0]]
  $region30: #{tpu_custom_call.1} parent=0
    _
  %s8 = ssub.s32 1, %s6
  %s9 = scalar_select 0, %s8, %s6
  $region1: #{tpu_custom_call.1} parent=0
    #allocation2 [shape = 'u8[4096]{0}', space=vmem, size = 0x1000, scoped, tag = 'output window, operand 0, single buffered']
    #allocation3 [shape = 's32[1]{0}', space=sflag, size = 0x4, scoped, tag = 'scoped memory for tpu_custom_call.1']
    %10 = vsyncpa [#allocation3], 0
    // Predicated region
    $region2: #{tpu_custom_call.1} parent=1 // pred_check
      _
    $region3: #{tpu_custom_call.1} parent=1 // pred_check_branch
      %12 = sbr.rel (0) target = $region5
    $region4: #{tpu_custom_call.1} parent=1 // pred_region
      _
    $region5: #{tpu_custom_call.1} parent=1 // pred_fallthru
      _
    // Predicated region
    $region6: #{tpu_custom_call.1} parent=1 // pred_check
      _
    $region7: #{tpu_custom_call.1} parent=1 // pred_check_branch
      %14 = sbr.rel (0) target = $region9
    $region8: #{tpu_custom_call.1} parent=1 // pred_region
      _
    $region9: #{tpu_custom_call.1} parent=1 // pred_fallthru
      _
    // Predicated region
    $region10: #{tpu_custom_call.1} parent=1 // pred_check
      _
    $region11: #{tpu_custom_call.1} parent=1 // pred_check_branch
      %16 = sbr.rel (0) target = $region13
    $region12: #{tpu_custom_call.1} parent=1 // pred_region
      _
    $region13: #{tpu_custom_call.1} parent=1 // pred_fallthru
      _
    // Predicated region
    $region14: #{tpu_custom_call.1} parent=1 // pred_check
      _
    $region15: #{tpu_custom_call.1} parent=1 // pred_check_branch
      %18 = sbr.rel (0) target = $region17
    $region16: #{tpu_custom_call.1} parent=1 // pred_region
      _
    $region17: #{tpu_custom_call.1} parent=1 // pred_fallthru
      _
    // Predicated region
    $region18: #{tpu_custom_call.1} parent=1 // pred_check
      _
    $region19: #{tpu_custom_call.1} parent=1 // pred_check_branch
      %20 = sbr.rel (0) target = $region21
    $region20: #{tpu_custom_call.1} parent=1 // pred_region
      _
    $region21: #{tpu_custom_call.1} parent=1 // pred_fallthru
      _
    %v22 = vld [vmem:[%s0] sm:$0xff]
    %v23 = vld [vmem:[%s0 + $0x8] sm:$0xff]
    %v24 = vld [vmem:[%s0 + $0x10] sm:$0xff]
    %v25 = vld [vmem:[%s0 + $0x18] sm:$0xff]
    %v26 = vld [vmem:[%s0 + $0x20] sm:$0xff]
    %v27 = vld [vmem:[%s0 + $0x28] sm:$0xff]
    %v28 = vld [vmem:[%s0 + $0x30] sm:$0xff]
    %v29 = vpack.c.bf16 %v22, %v22
    %v30 = vpack.c.bf16 %v23, %v23
    %v31 = vpack.c.bf16 %v24, %v24
    %v32 = vpack.c.bf16 %v25, %v25
    %v33 = vpack.c.bf16 %v26, %v26
    %v34 = vpack.c.bf16 %v27, %v27
    %v35 = vpack.c.bf16 %v28, %v28
    %v36 = vld [vmem:[%s1] sm:$0xff]
    %v37 = vld [vmem:[%s1 + $0x8] sm:$0xff]
    %v38 = vld [vmem:[%s1 + $0x10] sm:$0xff]
    %v39 = vld [vmem:[%s1 + $0x18] sm:$0xff]
    %v40 = vld [vmem:[%s1 + $0x20] sm:$0xff]
    %v41 = vld [vmem:[%s1 + $0x28] sm:$0xff]
    %v42 = vld [vmem:[%s1 + $0x30] sm:$0xff]
    %v43 = vld [vmem:[%s1 + $0x38] sm:$0xff]
    %v44 = vld [vmem:[%s1 + $0x40] sm:$0xff]
    %v45 = vld [vmem:[%s1 + $0x48] sm:$0xff]
    %v46 = vld [vmem:[%s1 + $0x50] sm:$0xff]
    %v47 = vld [vmem:[%s1 + $0x58] sm:$0xff]
    %v48 = vld [vmem:[%s1 + $0x60] sm:$0xff]
    %v49 = vld [vmem:[%s1 + $0x68] sm:$0xff]
    %v50 = vld [vmem:[%s1 + $0x70] sm:$0xff]
    %v51 = vld [vmem:[%s1 + $0x78] sm:$0xff]
    %v52 = vld [vmem:[%s1 + $0x80] sm:$0xff]
    %v53 = vld [vmem:[%s1 + $0x88] sm:$0xff]
    %v54 = vld [vmem:[%s1 + $0x90] sm:$0xff]
    %v55 = vld [vmem:[%s1 + $0x98] sm:$0xff]
    %v56 = vld [vmem:[%s1 + $0xa0] sm:$0xff]
    %v57 = vld [vmem:[%s1 + $0xa8] sm:$0xff]
    %v58 = vld [vmem:[%s1 + $0xb0] sm:$0xff]
    %v59 = vld [vmem:[%s1 + $0xb8] sm:$0xff]
    %v60 = vld [vmem:[%s1 + $0xc0] sm:$0xff]
    %v61 = vld [vmem:[%s1 + $0xc8] sm:$0xff]
    %v62 = vld [vmem:[%s1 + $0xd0] sm:$0xff]
    %v63 = vld [vmem:[%s1 + $0xd8] sm:$0xff]
    %v64 = vld [vmem:[%s1 + $0xe0] sm:$0xff]
    %v65 = vld [vmem:[%s1 + $0xe8] sm:$0xff]
    %v66 = vld [vmem:[%s1 + $0xf0] sm:$0xff]
    %v67 = vld [vmem:[%s1 + $0xf8] sm:$0xff]
    %v68 = vld [vmem:[%s1 + $0x100] sm:$0xff]
    %v69 = vld [vmem:[%s1 + $0x108] sm:$0xff]
    %v70 = vld [vmem:[%s1 + $0x110] sm:$0xff]
    %v71 = vld [vmem:[%s1 + $0x118] sm:$0xff]
    %v72 = vld [vmem:[%s1 + $0x120] sm:$0xff]
    %v73 = vld [vmem:[%s1 + $0x128] sm:$0xff]
    %v74 = vld [vmem:[%s1 + $0x130] sm:$0xff]
    %v75 = vld [vmem:[%s1 + $0x138] sm:$0xff]
    %v76 = vld [vmem:[%s1 + $0x140] sm:$0xff]
    %v77 = vld [vmem:[%s1 + $0x148] sm:$0xff]
    %v78 = vld [vmem:[%s1 + $0x150] sm:$0xff]
    %v79 = vld [vmem:[%s1 + $0x158] sm:$0xff]
    %v80 = vld [vmem:[%s1 + $0x160] sm:$0xff]
    %v81 = vld [vmem:[%s1 + $0x168] sm:$0xff]
    %v82 = vld [vmem:[%s1 + $0x170] sm:$0xff]
    %v83 = vld [vmem:[%s1 + $0x178] sm:$0xff]
    %v84 = vld [vmem:[%s1 + $0x180] sm:$0xff]
    %v85 = vld [vmem:[%s1 + $0x188] sm:$0xff]
    %v86 = vld [vmem:[%s1 + $0x190] sm:$0xff]
    %v87 = vld [vmem:[%s1 + $0x198] sm:$0xff]
    %v88 = vld [vmem:[%s1 + $0x1a0] sm:$0xff]
    %v89 = vld [vmem:[%s1 + $0x1a8] sm:$0xff]
    %v90 = vld [vmem:[%s1 + $0x1b0] sm:$0xff]
    %v91 = vld [vmem:[%s1 + $0x1b8] sm:$0xff]
    %v92 = vld [vmem:[%s1 + $0x1c0] sm:$0xff]
    %v93 = vld [vmem:[%s1 + $0x1c8] sm:$0xff]
    %v94 = vld [vmem:[%s1 + $0x1d0] sm:$0xff]
    %v95 = vld [vmem:[%s1 + $0x1d8] sm:$0xff]
    %v96 = vld [vmem:[%s1 + $0x1e0] sm:$0xff]
    %v97 = vld [vmem:[%s1 + $0x1e8] sm:$0xff]
    %v98 = vld [vmem:[%s1 + $0x1f0] sm:$0xff]
    %v99 = vld [vmem:[%s1 + $0x1f8] sm:$0xff]
    %v100 = vld [vmem:[%s1 + $0x200] sm:$0xff]
    %v101 = vld [vmem:[%s1 + $0x208] sm:$0xff]
    %v102 = vld [vmem:[%s1 + $0x210] sm:$0xff]
    %v103 = vld [vmem:[%s1 + $0x218] sm:$0xff]
    %v104 = vld [vmem:[%s1 + $0x220] sm:$0xff]
    %v105 = vld [vmem:[%s1 + $0x228] sm:$0xff]
    %v106 = vld [vmem:[%s1 + $0x230] sm:$0xff]
    %v107 = vld [vmem:[%s1 + $0x238] sm:$0xff]
    %v108 = vld [vmem:[%s1 + $0x240] sm:$0xff]
    %v109 = vld [vmem:[%s1 + $0x248] sm:$0xff]
    %v110 = vld [vmem:[%s1 + $0x250] sm:$0xff]
    %v111 = vld [vmem:[%s1 + $0x258] sm:$0xff]
    %v112 = vld [vmem:[%s1 + $0x260] sm:$0xff]
    %v113 = vld [vmem:[%s1 + $0x268] sm:$0xff]
    %v114 = vld [vmem:[%s1 + $0x270] sm:$0xff]
    %v115 = vld [vmem:[%s1 + $0x278] sm:$0xff]
    %v116 = vld [vmem:[%s1 + $0x280] sm:$0xff]
    %v117 = vld [vmem:[%s1 + $0x288] sm:$0xff]
    %v118 = vld [vmem:[%s1 + $0x290] sm:$0xff]
    %v119 = vld [vmem:[%s1 + $0x298] sm:$0xff]
    %v120 = vld [vmem:[%s1 + $0x2a0] sm:$0xff]
    %v121 = vld [vmem:[%s1 + $0x2a8] sm:$0xff]
    %v122 = vld [vmem:[%s1 + $0x2b0] sm:$0xff]
    %v123 = vld [vmem:[%s1 + $0x2b8] sm:$0xff]
    %v124 = vld [vmem:[%s1 + $0x2c0] sm:$0xff]
    %v125 = vld [vmem:[%s1 + $0x2c8] sm:$0xff]
    %v126 = vld [vmem:[%s1 + $0x2d0] sm:$0xff]
    %v127 = vld [vmem:[%s1 + $0x2d8] sm:$0xff]
    %v128 = vld [vmem:[%s1 + $0x2e0] sm:$0xff]
    %v129 = vld [vmem:[%s1 + $0x2e8] sm:$0xff]
    %v130 = vld [vmem:[%s1 + $0x2f0] sm:$0xff]
    %v131 = vld [vmem:[%s1 + $0x2f8] sm:$0xff]
    %v132 = vld [vmem:[%s1 + $0x300] sm:$0xff]
    %v133 = vld [vmem:[%s1 + $0x308] sm:$0xff]
    %v134 = vld [vmem:[%s2] sm:$0x3]
    %v136 = vlaneseq
    %v137 = vshrl.u32 %v136, 7
    %v138 = vsub.s32 0, %v137
    %v139 = vrot.slane %v134, %v138
    %v140 = vlaneseq
    %v141 = vshrl.u32 %v140, 7
    %v142 = vsub.s32 1, %v141
    %v143 = vrot.slane %v134, %v142
    %v244 = vunpack.c.l.b16 %v36
    %v245 = vunpack.c.h.b16 %v36
    %v246 = vunpack.c.l.b16 %v37
    %v247 = vunpack.c.h.b16 %v37
    %v248 = vunpack.c.l.b16 %v38
    %v249 = vunpack.c.h.b16 %v38
    %v250 = vunpack.c.l.b16 %v39
    %v251 = vunpack.c.h.b16 %v39
    %v252 = vunpack.c.l.b16 %v40
    %v253 = vunpack.c.h.b16 %v40
    %v254 = vunpack.c.l.b16 %v41
    %v255 = vunpack.c.h.b16 %v41
    %v256 = vunpack.c.l.b16 %v42
    %v257 = vunpack.c.h.b16 %v42
    %v258 = vunpack.c.l.b16 %v43
    %v259 = vunpack.c.h.b16 %v43
    %v260 = vunpack.c.l.b16 %v44
    %v261 = vunpack.c.h.b16 %v44
    %v262 = vunpack.c.l.b16 %v45
    %v263 = vunpack.c.h.b16 %v45
    %v264 = vunpack.c.l.b16 %v46
    %v265 = vunpack.c.h.b16 %v46
    %v266 = vunpack.c.l.b16 %v47
    %v267 = vunpack.c.h.b16 %v47
    %v268 = vunpack.c.l.b16 %v48
    %v269 = vunpack.c.h.b16 %v48
    %v270 = vunpack.c.l.b16 %v49
    %v271 = vunpack.c.h.b16 %v49
    %v272 = vunpack.c.l.b16 %v50
    %v273 = vunpack.c.h.b16 %v50
    %v274 = vunpack.c.l.b16 %v51
    %v275 = vunpack.c.h.b16 %v51
    %v276 = vunpack.c.l.b16 %v52
    %v277 = vunpack.c.h.b16 %v52
    %v278 = vunpack.c.l.b16 %v53
    %v279 = vunpack.c.h.b16 %v53
    %v280 = vunpack.c.l.b16 %v54
    %v281 = vunpack.c.h.b16 %v54
    %v282 = vunpack.c.l.b16 %v55
    %v283 = vunpack.c.h.b16 %v55
    %v284 = vunpack.c.l.b16 %v56
    %v285 = vunpack.c.h.b16 %v56
    %v286 = vunpack.c.l.b16 %v57
    %v287 = vunpack.c.h.b16 %v57
    %v288 = vunpack.c.l.b16 %v58
    %v289 = vunpack.c.h.b16 %v58
    %v290 = vunpack.c.l.b16 %v59
    %v291 = vunpack.c.h.b16 %v59
    %v292 = vunpack.c.l.b16 %v60
    %v293 = vunpack.c.h.b16 %v60
    %v294 = vunpack.c.l.b16 %v61
    %v295 = vunpack.c.h.b16 %v61
    %v296 = vunpack.c.l.b16 %v62
    %v297 = vunpack.c.h.b16 %v62
    %v298 = vunpack.c.l.b16 %v63
    %v299 = vunpack.c.h.b16 %v63
    %v300 = vunpack.c.l.b16 %v64
    %v301 = vunpack.c.h.b16 %v64
    %v302 = vunpack.c.l.b16 %v65
    %v303 = vunpack.c.h.b16 %v65
    %v304 = vunpack.c.l.b16 %v66
    %v305 = vunpack.c.h.b16 %v66
    %v306 = vunpack.c.l.b16 %v67
    %v307 = vunpack.c.h.b16 %v67
    %v308 = vunpack.c.l.b16 %v68
    %v309 = vunpack.c.h.b16 %v68
    %v310 = vunpack.c.l.b16 %v69
    %v311 = vunpack.c.h.b16 %v69
    %v312 = vunpack.c.l.b16 %v70
    %v313 = vunpack.c.h.b16 %v70
    %v314 = vunpack.c.l.b16 %v71
    %v315 = vunpack.c.h.b16 %v71
    %v316 = vunpack.c.l.b16 %v72
    %v317 = vunpack.c.h.b16 %v72
    %v318 = vunpack.c.l.b16 %v73
    %v319 = vunpack.c.h.b16 %v73
    %v320 = vunpack.c.l.b16 %v74
    %v321 = vunpack.c.h.b16 %v74
    %v322 = vunpack.c.l.b16 %v75
    %v323 = vunpack.c.h.b16 %v75
    %v324 = vunpack.c.l.b16 %v76
    %v325 = vunpack.c.h.b16 %v76
    %v326 = vunpack.c.l.b16 %v77
    %v327 = vunpack.c.h.b16 %v77
    %v328 = vunpack.c.l.b16 %v78
    %v329 = vunpack.c.h.b16 %v78
    %v330 = vunpack.c.l.b16 %v79
    %v331 = vunpack.c.h.b16 %v79
    %v332 = vunpack.c.l.b16 %v80
    %v333 = vunpack.c.h.b16 %v80
    %v334 = vunpack.c.l.b16 %v81
    %v335 = vunpack.c.h.b16 %v81
    %v336 = vunpack.c.l.b16 %v82
    %v337 = vunpack.c.h.b16 %v82
    %v338 = vunpack.c.l.b16 %v83
    %v339 = vunpack.c.h.b16 %v83
    %v340 = vunpack.c.l.b16 %v84
    %v341 = vunpack.c.h.b16 %v84
    %v342 = vunpack.c.l.b16 %v85
    %v343 = vunpack.c.h.b16 %v85
    %v344 = vunpack.c.l.b16 %v86
    %v345 = vunpack.c.h.b16 %v86
    %v346 = vunpack.c.l.b16 %v87
    %v347 = vunpack.c.h.b16 %v87
    %v348 = vunpack.c.l.b16 %v88
    %v349 = vunpack.c.h.b16 %v88
    %v350 = vunpack.c.l.b16 %v89
    %v351 = vunpack.c.h.b16 %v89
    %v352 = vunpack.c.l.b16 %v90
    %v353 = vunpack.c.h.b16 %v90
    %v354 = vunpack.c.l.b16 %v91
    %v355 = vunpack.c.h.b16 %v91
    %v356 = vunpack.c.l.b16 %v92
    %v357 = vunpack.c.h.b16 %v92
    %v358 = vunpack.c.l.b16 %v93
    %v359 = vunpack.c.h.b16 %v93
    %v360 = vunpack.c.l.b16 %v94
    %v361 = vunpack.c.h.b16 %v94
    %v362 = vunpack.c.l.b16 %v95
    %v363 = vunpack.c.h.b16 %v95
    %v364 = vunpack.c.l.b16 %v96
    %v365 = vunpack.c.h.b16 %v96
    %v366 = vunpack.c.l.b16 %v97
    %v367 = vunpack.c.h.b16 %v97
    %v368 = vunpack.c.l.b16 %v98
    %v369 = vunpack.c.h.b16 %v98
    %v370 = vunpack.c.l.b16 %v99
    %v371 = vunpack.c.h.b16 %v99
    %v372 = vunpack.c.l.b16 %v100
    %v373 = vunpack.c.h.b16 %v100
    %v374 = vunpack.c.l.b16 %v101
    %v375 = vunpack.c.h.b16 %v101
    %v376 = vunpack.c.l.b16 %v102
    %v377 = vunpack.c.h.b16 %v102
    %v378 = vunpack.c.l.b16 %v103
    %v379 = vunpack.c.h.b16 %v103
    %v380 = vunpack.c.l.b16 %v104
    %v381 = vunpack.c.h.b16 %v104
    %v382 = vunpack.c.l.b16 %v105
    %v383 = vunpack.c.h.b16 %v105
    %v384 = vunpack.c.l.b16 %v106
    %v385 = vunpack.c.h.b16 %v106
    %v386 = vunpack.c.l.b16 %v107
    %v387 = vunpack.c.h.b16 %v107
    %v388 = vunpack.c.l.b16 %v108
    %v389 = vunpack.c.h.b16 %v108
    %v390 = vunpack.c.l.b16 %v109
    %v391 = vunpack.c.h.b16 %v109
    %v392 = vunpack.c.l.b16 %v110
    %v393 = vunpack.c.h.b16 %v110
    %v394 = vunpack.c.l.b16 %v111
    %v395 = vunpack.c.h.b16 %v111
    %v396 = vunpack.c.l.b16 %v112
    %v397 = vunpack.c.h.b16 %v112
    %v398 = vunpack.c.l.b16 %v113
    %v399 = vunpack.c.h.b16 %v113
    %v400 = vunpack.c.l.b16 %v114
    %v401 = vunpack.c.h.b16 %v114
    %v402 = vunpack.c.l.b16 %v115
    %v403 = vunpack.c.h.b16 %v115
    %v404 = vunpack.c.l.b16 %v116
    %v405 = vunpack.c.h.b16 %v116
    %v406 = vunpack.c.l.b16 %v117
    %v407 = vunpack.c.h.b16 %v117
    %v408 = vunpack.c.l.b16 %v118
    %v409 = vunpack.c.h.b16 %v118
    %v410 = vunpack.c.l.b16 %v119
    %v411 = vunpack.c.h.b16 %v119
    %v412 = vunpack.c.l.b16 %v120
    %v413 = vunpack.c.h.b16 %v120
    %v414 = vunpack.c.l.b16 %v121
    %v415 = vunpack.c.h.b16 %v121
    %v416 = vunpack.c.l.b16 %v122
    %v417 = vunpack.c.h.b16 %v122
    %v418 = vunpack.c.l.b16 %v123
    %v419 = vunpack.c.h.b16 %v123
    %v420 = vunpack.c.l.b16 %v124
    %v421 = vunpack.c.h.b16 %v124
    %v422 = vunpack.c.l.b16 %v125
    %v423 = vunpack.c.h.b16 %v125
    %v424 = vunpack.c.l.b16 %v126
    %v425 = vunpack.c.h.b16 %v126
    %v426 = vunpack.c.l.b16 %v127
    %v427 = vunpack.c.h.b16 %v127
    %v428 = vunpack.c.l.b16 %v128
    %v429 = vunpack.c.h.b16 %v128
    %v430 = vunpack.c.l.b16 %v129
    %v431 = vunpack.c.h.b16 %v129
    %v432 = vunpack.c.l.b16 %v130
    %v433 = vunpack.c.h.b16 %v130
    %v434 = vunpack.c.l.b16 %v131
    %v435 = vunpack.c.h.b16 %v131
    %v436 = vunpack.c.l.b16 %v132
    %v437 = vunpack.c.h.b16 %v132
    %v438 = vunpack.c.l.b16 %v133
    %v439 = vunpack.c.h.b16 %v133
    %v440 = vpack.c.b16 %v246, %v244
    %v441 = vpack.c.b16 %v247, %v245
    %v442 = vpack.c.b16 %v250, %v248
    %v443 = vpack.c.b16 %v251, %v249
    %v444 = vpack.c.b16 %v254, %v252
    %v445 = vpack.c.b16 %v255, %v253
    %v446 = vpack.c.b16 %v258, %v256
    %v447 = vpack.c.b16 %v259, %v257
    %v448 = vpack.c.b16 %v262, %v260
    %v449 = vpack.c.b16 %v263, %v261
    %v450 = vpack.c.b16 %v266, %v264
    %v451 = vpack.c.b16 %v267, %v265
    %v452 = vpack.c.b16 %v270, %v268
    %v453 = vpack.c.b16 %v271, %v269
    %v454 = vpack.c.b16 %v274, %v272
    %v455 = vpack.c.b16 %v275, %v273
    %v456 = vpack.c.b16 %v278, %v276
    %v457 = vpack.c.b16 %v279, %v277
    %v458 = vpack.c.b16 %v282, %v280
    %v459 = vpack.c.b16 %v283, %v281
    %v460 = vpack.c.b16 %v286, %v284
    %v461 = vpack.c.b16 %v287, %v285
    %v462 = vpack.c.b16 %v290, %v288
    %v463 = vpack.c.b16 %v291, %v289
    %v464 = vpack.c.b16 %v294, %v292
    %v465 = vpack.c.b16 %v295, %v293
    %v466 = vpack.c.b16 %v298, %v296
    %v467 = vpack.c.b16 %v299, %v297
    %v468 = vpack.c.b16 %v302, %v300
    %v469 = vpack.c.b16 %v303, %v301
    %v470 = vpack.c.b16 %v306, %v304
    %v471 = vpack.c.b16 %v307, %v305
    %v472 = vpack.c.b16 %v310, %v308
    %v473 = vpack.c.b16 %v311, %v309
    %v474 = vpack.c.b16 %v314, %v312
    %v475 = vpack.c.b16 %v315, %v313
    %v476 = vpack.c.b16 %v318, %v316
    %v477 = vpack.c.b16 %v319, %v317
    %v478 = vpack.c.b16 %v322, %v320
    %v479 = vpack.c.b16 %v323, %v321
    %v480 = vpack.c.b16 %v326, %v324
    %v481 = vpack.c.b16 %v327, %v325
    %v482 = vpack.c.b16 %v330, %v328
    %v483 = vpack.c.b16 %v331, %v329
    %v484 = vpack.c.b16 %v334, %v332
    %v485 = vpack.c.b16 %v335, %v333
    %v486 = vpack.c.b16 %v338, %v336
    %v487 = vpack.c.b16 %v339, %v337
    %v488 = vpack.c.b16 %v342, %v340
    %v489 = vpack.c.b16 %v343, %v341
    %v490 = vpack.c.b16 %v346, %v344
    %v491 = vpack.c.b16 %v347, %v345
    %v492 = vpack.c.b16 %v350, %v348
    %v493 = vpack.c.b16 %v351, %v349
    %v494 = vpack.c.b16 %v354, %v352
    %v495 = vpack.c.b16 %v355, %v353
    %v496 = vpack.c.b16 %v358, %v356
    %v497 = vpack.c.b16 %v359, %v357
    %v498 = vpack.c.b16 %v362, %v360
    %v499 = vpack.c.b16 %v363, %v361
    %v500 = vpack.c.b16 %v366, %v364
    %v501 = vpack.c.b16 %v367, %v365
    %v502 = vpack.c.b16 %v370, %v368
    %v503 = vpack.c.b16 %v371, %v369
    %v504 = vpack.c.b16 %v374, %v372
    %v505 = vpack.c.b16 %v375, %v373
    %v506 = vpack.c.b16 %v378, %v376
    %v507 = vpack.c.b16 %v379, %v377
    %v508 = vpack.c.b16 %v382, %v380
    %v509 = vpack.c.b16 %v383, %v381
    %v510 = vpack.c.b16 %v386, %v384
    %v511 = vpack.c.b16 %v387, %v385
    %v512 = vpack.c.b16 %v390, %v388
    %v513 = vpack.c.b16 %v391, %v389
    %v514 = vpack.c.b16 %v394, %v392
    %v515 = vpack.c.b16 %v395, %v393
    %v516 = vpack.c.b16 %v398, %v396
    %v517 = vpack.c.b16 %v399, %v397
    %v518 = vpack.c.b16 %v402, %v400
    %v519 = vpack.c.b16 %v403, %v401
    %v520 = vpack.c.b16 %v406, %v404
    %v521 = vpack.c.b16 %v407, %v405
    %v522 = vpack.c.b16 %v410, %v408
    %v523 = vpack.c.b16 %v411, %v409
    %v524 = vpack.c.b16 %v414, %v412
    %v525 = vpack.c.b16 %v415, %v413
    %v526 = vpack.c.b16 %v418, %v416
    %v527 = vpack.c.b16 %v419, %v417
    %v528 = vpack.c.b16 %v422, %v420
    %v529 = vpack.c.b16 %v423, %v421
    %v530 = vpack.c.b16 %v426, %v424
    %v531 = vpack.c.b16 %v427, %v425
    %v532 = vpack.c.b16 %v430, %v428
    %v533 = vpack.c.b16 %v431, %v429
    %v534 = vpack.c.b16 %v434, %v432
    %v535 = vpack.c.b16 %v435, %v433
    %v536 = vpack.c.b16 %v438, %v436
    %v537 = vpack.c.b16 %v439, %v437
    %vm636 = vcmask 130048
    %v638 = vsel %vm636, %v35, 0
    %640 = vmatprep.subr.bf16.mxu0 %v441
    %641 = vmatpush1.bf16.msra.mxu0 %v440
    %642 = vmatprep.subr.bf16.mxu0 %v443
    %643 = vmatpush1.bf16.msra.mxu0 %v442
    %644 = vmatprep.subr.bf16.mxu0 %v445
    %645 = vmatpush1.bf16.msra.mxu0 %v444
    %646 = vmatprep.subr.bf16.mxu0 %v447
    %647 = vmatpush1.bf16.msra.mxu0 %v446
    %648 = vmatprep.subr.bf16.mxu0 %v449
    %649 = vmatpush1.bf16.msra.mxu0 %v448
    %650 = vmatprep.subr.bf16.mxu0 %v451
    %651 = vmatpush1.bf16.msra.mxu0 %v450
    %652 = vmatprep.subr.bf16.mxu0 %v453
    %653 = vmatpush1.bf16.msra.mxu0 %v452
    %654 = vmatprep.subr.bf16.mxu0 %v455
    %655 = vmatpush1.bf16.msra.mxu0 %v454
    %656 = vmatprep.subr.bf16.mxu0 %v457
    %657 = vmatpush1.bf16.msra.mxu0 %v456
    %658 = vmatprep.subr.bf16.mxu0 %v459
    %659 = vmatpush1.bf16.msra.mxu0 %v458
    %660 = vmatprep.subr.bf16.mxu0 %v461
    %661 = vmatpush1.bf16.msra.mxu0 %v460
    %662 = vmatprep.subr.bf16.mxu0 %v463
    %663 = vmatpush1.bf16.msra.mxu0 %v462
    %664 = vmatprep.subr.bf16.mxu0 %v465
    %665 = vmatpush1.bf16.msra.mxu0 %v464
    %666 = vmatprep.subr.bf16.mxu0 %v467
    %667 = vmatpush1.bf16.msra.mxu0 %v466
    %668 = vmatprep.subr.bf16.mxu0 %v469
    %669 = vmatpush1.bf16.msra.mxu0 %v468
    %670 = vmatprep.subr.bf16.mxu0 %v471
    %671 = vmatpush1.bf16.msra.mxu0 %v470
    %672 = vmatprep.mubr.bf16.mxu0 %v30
    %673 = vmatmul.mubr.bf16.gmra.mrb[0].mxu0 %v29
    %v674 = vpop.f32.mrb[0].mxu0
    %v675 = vadd.f32 %v139, %v674
    %v676 = vpop.f32.mrb[0].mxu0
    %v677 = vadd.f32 %v143, %v676
    %v678 = vpop.f32.mrb[0].mxu0
    %v679 = vpop.f32.mrb[0].mxu0
    %680 = vdwg.mxu0
    %681 = vmatprep.subr.bf16.mxu0 %v473
    %682 = vmatpush1.bf16.msra.mxu0 %v472
    %683 = vmatprep.subr.bf16.mxu0 %v475
    %684 = vmatpush1.bf16.msra.mxu0 %v474
    %685 = vmatprep.subr.bf16.mxu0 %v477
    %686 = vmatpush1.bf16.msra.mxu0 %v476
    %687 = vmatprep.subr.bf16.mxu0 %v479
    %688 = vmatpush1.bf16.msra.mxu0 %v478
    %689 = vmatprep.subr.bf16.mxu0 %v481
    %690 = vmatpush1.bf16.msra.mxu0 %v480
    %691 = vmatprep.subr.bf16.mxu0 %v483
    %692 = vmatpush1.bf16.msra.mxu0 %v482
    %693 = vmatprep.subr.bf16.mxu0 %v485
    %694 = vmatpush1.bf16.msra.mxu0 %v484
    %695 = vmatprep.subr.bf16.mxu0 %v487
    %696 = vmatpush1.bf16.msra.mxu0 %v486
    %697 = vmatprep.subr.bf16.mxu0 %v489
    %698 = vmatpush1.bf16.msra.mxu0 %v488
    %699 = vmatprep.subr.bf16.mxu0 %v491
    %700 = vmatpush1.bf16.msra.mxu0 %v490
    %701 = vmatprep.subr.bf16.mxu0 %v493
    %702 = vmatpush1.bf16.msra.mxu0 %v492
    %703 = vmatprep.subr.bf16.mxu0 %v495
    %704 = vmatpush1.bf16.msra.mxu0 %v494
    %705 = vmatprep.subr.bf16.mxu0 %v497
    %706 = vmatpush1.bf16.msra.mxu0 %v496
    %707 = vmatprep.subr.bf16.mxu0 %v499
    %708 = vmatpush1.bf16.msra.mxu0 %v498
    %709 = vmatprep.subr.bf16.mxu0 %v501
    %710 = vmatpush1.bf16.msra.mxu0 %v500
    %711 = vmatprep.subr.bf16.mxu0 %v503
    %712 = vmatpush1.bf16.msra.mxu0 %v502
    %713 = vmatprep.mubr.bf16.mxu0 %v32
    %714 = vmatmul.mubr.bf16.gmra.mrb[0].mxu0 %v31
    %v715 = vpop.f32.mrb[0].mxu0
    %v716 = vadd.f32 %v675, %v715
    %v717 = vpop.f32.mrb[0].mxu0
    %v718 = vadd.f32 %v677, %v717
    %v719 = vpop.f32.mrb[0].mxu0
    %v720 = vpop.f32.mrb[0].mxu0
    %721 = vdwg.mxu0
    %722 = vmatprep.subr.bf16.mxu0 %v505
    %723 = vmatpush1.bf16.msra.mxu0 %v504
    %724 = vmatprep.subr.bf16.mxu0 %v507
    %725 = vmatpush1.bf16.msra.mxu0 %v506
    %726 = vmatprep.subr.bf16.mxu0 %v509
    %727 = vmatpush1.bf16.msra.mxu0 %v508
    %728 = vmatprep.subr.bf16.mxu0 %v511
    %729 = vmatpush1.bf16.msra.mxu0 %v510
    %730 = vmatprep.subr.bf16.mxu0 %v513
    %731 = vmatpush1.bf16.msra.mxu0 %v512
    %732 = vmatprep.subr.bf16.mxu0 %v515
    %733 = vmatpush1.bf16.msra.mxu0 %v514
    %734 = vmatprep.subr.bf16.mxu0 %v517
    %735 = vmatpush1.bf16.msra.mxu0 %v516
    %736 = vmatprep.subr.bf16.mxu0 %v519
    %737 = vmatpush1.bf16.msra.mxu0 %v518
    %738 = vmatprep.subr.bf16.mxu0 %v521
    %739 = vmatpush1.bf16.msra.mxu0 %v520
    %740 = vmatprep.subr.bf16.mxu0 %v523
    %741 = vmatpush1.bf16.msra.mxu0 %v522
    %742 = vmatprep.subr.bf16.mxu0 %v525
    %743 = vmatpush1.bf16.msra.mxu0 %v524
    %744 = vmatprep.subr.bf16.mxu0 %v527
    %745 = vmatpush1.bf16.msra.mxu0 %v526
    %746 = vmatprep.subr.bf16.mxu0 %v529
    %747 = vmatpush1.bf16.msra.mxu0 %v528
    %748 = vmatprep.subr.bf16.mxu0 %v531
    %749 = vmatpush1.bf16.msra.mxu0 %v530
    %750 = vmatprep.subr.bf16.mxu0 %v533
    %751 = vmatpush1.bf16.msra.mxu0 %v532
    %752 = vmatprep.subr.bf16.mxu0 %v535
    %753 = vmatpush1.bf16.msra.mxu0 %v534
    %754 = vmatprep.mubr.bf16.mxu0 %v34
    %755 = vmatmul.mubr.bf16.gmra.mrb[0].mxu0 %v33
    %v756 = vpop.f32.mrb[0].mxu0
    %v757 = vadd.f32 %v716, %v756
    %v758 = vpop.f32.mrb[0].mxu0
    %v759 = vadd.f32 %v718, %v758
    %v760 = vpop.f32.mrb[0].mxu0
    %v761 = vpop.f32.mrb[0].mxu0
    %762 = vdwg.mxu0
    %763 = vmatprep.subr.bf16.mxu0 %v537
    %764 = vmatpush1.bf16.msra.mxu0 %v536
    %765 = vmatprep.subr.bf16.mxu0 0
    %766 = vmatpush1.bf16.msra.mxu0 0
    %767 = vmatprep.subr.bf16.mxu0 0
    %768 = vmatpush1.bf16.msra.mxu0 0
    %769 = vmatprep.subr.bf16.mxu0 0
    %770 = vmatpush1.bf16.msra.mxu0 0
    %771 = vmatprep.subr.bf16.mxu0 0
    %772 = vmatpush1.bf16.msra.mxu0 0
    %773 = vmatprep.subr.bf16.mxu0 0
    %774 = vmatpush1.bf16.msra.mxu0 0
    %775 = vmatprep.subr.bf16.mxu0 0
    %776 = vmatpush1.bf16.msra.mxu0 0
    %777 = vmatprep.subr.bf16.mxu0 0
    %778 = vmatpush1.bf16.msra.mxu0 0
    %779 = vmatprep.subr.bf16.mxu0 0
    %780 = vmatpush1.bf16.msra.mxu0 0
    %781 = vmatprep.subr.bf16.mxu0 0
    %782 = vmatpush1.bf16.msra.mxu0 0
    %783 = vmatprep.subr.bf16.mxu0 0
    %784 = vmatpush1.bf16.msra.mxu0 0
    %785 = vmatprep.subr.bf16.mxu0 0
    %786 = vmatpush1.bf16.msra.mxu0 0
    %787 = vmatprep.subr.bf16.mxu0 0
    %788 = vmatpush1.bf16.msra.mxu0 0
    %789 = vmatprep.subr.bf16.mxu0 0
    %790 = vmatpush1.bf16.msra.mxu0 0
    %791 = vmatprep.subr.bf16.mxu0 0
    %792 = vmatpush1.bf16.msra.mxu0 0
    %793 = vmatprep.subr.bf16.mxu0 0
    %794 = vmatpush1.bf16.msra.mxu0 0
    %795 = vmatprep.mubr.bf16.mxu0 0
    %796 = vmatmul.mubr.bf16.gmra.mrb[0].mxu0 %v638
    %v797 = vpop.f32.mrb[0].mxu0
    %v798 = vadd.f32 %v757, %v797
    %v799 = vpop.f32.mrb[0].mxu0
    %v800 = vadd.f32 %v759, %v799
    %v801 = vpop.f32.mrb[0].mxu0
    %v802 = vpop.f32.mrb[0].mxu0
    %803 = vdwg.mxu0
    %v804 = vxor.u32 %v798, 2147483648
    %v805 = vxor.u32 %v800, 2147483648
    %v806 = vmul.f32 %v804, 1.442695
    %v807 = vpow.pop %v806
    %v808 = vmul.f32 %v805, 1.442695
    %v809 = vpow.pop %v808
    %v810 = vadd.f32 %v807, 1.0
    %v811 = vadd.f32 %v809, 1.0
    %v812 = vrcp.pop %v810
    %v813 = vmul.f32 1.0, %v812
    %v814 = vrcp.pop %v811
    %v815 = vmul.f32 1.0, %v814
    %vm816 = vcmask 588800
    %v817 = vsel %vm816, %v815, 0.0
    %v818 = vadd.f32 %v813, %v817
    %819 = vadd.xlane.f32.xlu0 %v818
    %v820 = vpop.xlane.xlu0 %819
    %v821 = vmul.f32 %v813, %v813
    %v822 = vmul.f32 %v815, %v815
    %v823 = vsel %vm816, %v822, 0.0
    %v824 = vadd.f32 %v821, %v823
    %825 = vadd.xlane.f32.xlu0 %v824
    %v826 = vpop.xlane.xlu0 %825
    %v827 = vmul.f32 %v820, 0.005
    %v828 = vmul.f32 %v826, 0.005
    %v829 = vmul.f32 %v827, %v827
    %v830 = vsub.f32 %v828, %v829
    %v831 = vsub.f32 %v813, %v827
    %v832 = vsub.f32 %v815, %v827
    %v833 = vadd.f32 %v830, 1e-05
    %v834 = vrsqrt.pop %v833
    %v835 = vmul.f32 %v831, %v834
    %v836 = vmul.f32 %v832, %v834
    %v837 = vpack.c.bf16 %v835, %v835
    %v838 = vpack.c.bf16 %v836, %v836
    %v839 = vld [vmem:[%s3] sm:$0xf]
    %v840 = vld [vmem:[%s3 + $0x4] sm:$0xf]
    %v841 = vld [vmem:[%s3 + $0x8] sm:$0xf]
    %v842 = vld [vmem:[%s3 + $0xc] sm:$0xf]
    %v843 = vld [vmem:[%s3 + $0x10] sm:$0xf]
    %v844 = vld [vmem:[%s3 + $0x14] sm:$0xf]
    %v845 = vld [vmem:[%s3 + $0x18] sm:$0xf]
    %v846 = vld [vmem:[%s3 + $0x1c] sm:$0xf]
    %v847 = vld [vmem:[%s3 + $0x20] sm:$0xf]
    %v848 = vld [vmem:[%s3 + $0x24] sm:$0xf]
    %v849 = vld [vmem:[%s3 + $0x28] sm:$0xf]
    %v850 = vld [vmem:[%s3 + $0x2c] sm:$0xf]
    %v851 = vld [vmem:[%s3 + $0x30] sm:$0xf]
    %v852 = vld [vmem:[%s3 + $0x34] sm:$0xf]
    %v853 = vld [vmem:[%s3 + $0x38] sm:$0xf]
    %v854 = vld [vmem:[%s3 + $0x3c] sm:$0xf]
    %v855 = vld [vmem:[%s3 + $0x40] sm:$0xf]
    %v856 = vld [vmem:[%s3 + $0x44] sm:$0xf]
    %v857 = vld [vmem:[%s3 + $0x48] sm:$0xf]
    %v858 = vld [vmem:[%s3 + $0x4c] sm:$0xf]
    %v859 = vld [vmem:[%s3 + $0x50] sm:$0xf]
    %v860 = vld [vmem:[%s3 + $0x54] sm:$0xf]
    %v861 = vld [vmem:[%s3 + $0x58] sm:$0xf]
    %v862 = vld [vmem:[%s3 + $0x5c] sm:$0xf]
    %v863 = vld [vmem:[%s3 + $0x60] sm:$0xf]
    %v864 = vld [vmem:[%s4] sm:$0x1]
    %v866 = vlaneseq
    %v867 = vshrl.u32 %v866, 7
    %v868 = vsub.s32 0, %v867
    %v869 = vrot.slane %v864, %v868
    %v896 = vunpack.c.l.b16 %v839
    %v897 = vunpack.c.l.b16 %v840
    %v898 = vunpack.c.l.b16 %v841
    %v899 = vunpack.c.l.b16 %v842
    %v900 = vunpack.c.l.b16 %v843
    %v901 = vunpack.c.l.b16 %v844
    %v902 = vunpack.c.l.b16 %v845
    %v903 = vunpack.c.l.b16 %v846
    %v904 = vunpack.c.l.b16 %v847
    %v905 = vunpack.c.l.b16 %v848
    %v906 = vunpack.c.l.b16 %v849
    %v907 = vunpack.c.l.b16 %v850
    %v908 = vunpack.c.l.b16 %v851
    %v909 = vunpack.c.l.b16 %v852
    %v910 = vunpack.c.l.b16 %v853
    %v911 = vunpack.c.l.b16 %v854
    %v912 = vunpack.c.l.b16 %v855
    %v913 = vunpack.c.l.b16 %v856
    %v914 = vunpack.c.l.b16 %v857
    %v915 = vunpack.c.l.b16 %v858
    %v916 = vunpack.c.l.b16 %v859
    %v917 = vunpack.c.l.b16 %v860
    %v918 = vunpack.c.l.b16 %v861
    %v919 = vunpack.c.l.b16 %v862
    %v920 = vunpack.c.l.b16 %v863
    %v921 = vpack.c.b16 %v897, %v896
    %v922 = vpack.c.b16 %v899, %v898
    %v923 = vpack.c.b16 %v901, %v900
    %v924 = vpack.c.b16 %v903, %v902
    %v925 = vpack.c.b16 %v905, %v904
    %v926 = vpack.c.b16 %v907, %v906
    %v927 = vpack.c.b16 %v909, %v908
    %v928 = vpack.c.b16 %v911, %v910
    %v929 = vpack.c.b16 %v913, %v912
    %v930 = vpack.c.b16 %v915, %v914
    %v931 = vpack.c.b16 %v917, %v916
    %v932 = vpack.c.b16 %v919, %v918
    %v933 = vpack.c.b16 %v920, %v920
    %v947 = vsel %vm816, %v838, 0
    %vm949 = vcmask 1043456
    %v951 = vsel %vm949, %v933, 0
    %953 = vmatprep.subr.bf16.mxu0 0
    %954 = vmatpush1.bf16.msra.mxu0 %v921
    %955 = vmatprep.subr.bf16.mxu0 0
    %956 = vmatpush1.bf16.msra.mxu0 %v922
    %957 = vmatprep.subr.bf16.mxu0 0
    %958 = vmatpush1.bf16.msra.mxu0 %v923
    %959 = vmatprep.subr.bf16.mxu0 0
    %960 = vmatpush1.bf16.msra.mxu0 %v924
    %961 = vmatprep.subr.bf16.mxu0 0
    %962 = vmatpush1.bf16.msra.mxu0 %v925
    %963 = vmatprep.subr.bf16.mxu0 0
    %964 = vmatpush1.bf16.msra.mxu0 %v926
    %965 = vmatprep.subr.bf16.mxu0 0
    %966 = vmatpush1.bf16.msra.mxu0 %v927
    %967 = vmatprep.subr.bf16.mxu0 0
    %968 = vmatpush1.bf16.msra.mxu0 %v928
    %969 = vmatprep.subr.bf16.mxu0 0
    %970 = vmatpush1.bf16.msra.mxu0 %v929
    %971 = vmatprep.subr.bf16.mxu0 0
    %972 = vmatpush1.bf16.msra.mxu0 %v930
    %973 = vmatprep.subr.bf16.mxu0 0
    %974 = vmatpush1.bf16.msra.mxu0 %v931
    %975 = vmatprep.subr.bf16.mxu0 0
    %976 = vmatpush1.bf16.msra.mxu0 %v932
    %977 = vmatprep.subr.bf16.mxu0 0
    %978 = vmatpush1.bf16.msra.mxu0 %v951
    %979 = vmatprep.subr.bf16.mxu0 0
    %980 = vmatpush1.bf16.msra.mxu0 0
    %981 = vmatprep.subr.bf16.mxu0 0
    %982 = vmatpush1.bf16.msra.mxu0 0
    %983 = vmatprep.subr.bf16.mxu0 0
    %984 = vmatpush1.bf16.msra.mxu0 0
    %985 = vmatprep.mubr.bf16.mxu0 %v947
    %986 = vmatmul.mubr.bf16.gmra.mrb[0].mxu0 %v837
    %v987 = vpop.f32.mrb[0].mxu0
    %v988 = vadd.f32 %v869, %v987
    %v989 = vpop.f32.mrb[0].mxu0
    %v990 = vpop.f32.mrb[0].mxu0
    %v991 = vpop.f32.mrb[0].mxu0
    %992 = vdwg.mxu0
    %v993 = vxor.u32 %v988, 2147483648
    %v994 = vmul.f32 %v993, 1.442695
    %v995 = vpow.pop %v994
    %v996 = vadd.f32 %v995, 1.0
    %v997 = vrcp.pop %v996
    %v998 = vmul.f32 1.0, %v997
    %vm999 = vcmask 80896
    %1000 = vst.msk [vmem:[#allocation2] sm:$0xff] %vm999, %v998
    // Predicated region
    $region22: #{tpu_custom_call.1} parent=1 // pred_check
      _
    $region23: #{tpu_custom_call.1} parent=1 // pred_check_branch
      %1002 = sbr.rel (0) target = $region25
    $region24: #{tpu_custom_call.1} parent=1 // pred_region
      %s1004 = ssub.s32 128, 128
      %1005 = vsyncadd [#allocation3], %s1004
      %s1007 = sshll.u32 [#allocation2], 4
      %s1008 = int_to_ptr.vmem [resolvable:$true] %s1007
      %1010 = dma.vmem_to_hbm [thread:$0]  %s1008, 128, %s5, [#allocation3]
    $region25: #{tpu_custom_call.1} parent=1 // pred_fallthru
      _
    // Predicated region
    $region26: #{tpu_custom_call.1} parent=1 // pred_check
      _
    $region27: #{tpu_custom_call.1} parent=1 // pred_check_branch
      %1012 = sbr.rel (0) target = $region29
    $region28: #{tpu_custom_call.1} parent=1 // pred_region
      %1013 = dma.done [#allocation3], 128
    $region29: #{tpu_custom_call.1} parent=1 // pred_fallthru
      _
    %1014 = vsyncpa [#allocation3], 1

</llo_original>
